<compile_context>
chip_gen: v7x
topology: tpu7x:2x2x1
jax: 0.10.0
libtpu: 0.0.40
codegen_flags: <defaults>
</compile_context>

<pallas_src>
from typing import NamedTuple, Tuple

import jax
import jax.numpy as jnp
from jax.experimental import pallas as pl
from jax.experimental.pallas import tpu as pltpu


def _round_up(x, m):
    return ((x + m - 1) // m) * m


class PreparedParams(NamedTuple):
    """Weights cast/padded once so per-call forward does no weight-side work."""
    weights: Tuple[jax.Array, jax.Array, jax.Array, jax.Array]  # [in, out], compute dtype
    biases: Tuple[jax.Array, jax.Array, jax.Array, jax.Array]   # [1, out], f32
    action_dim: int                                             # true (unpadded) output dim


def prepare_params(params, compute_dtype=jnp.bfloat16):
    """One-time parameter prep: cast weights to the MXU compute dtype, pad the
    final layer to a lane-dense output width, reshape biases to [1, out] f32."""
    (w1, b1), (w2, b2), (w3, b3), (w4, b4) = params
    action_dim = w4.shape[1]
    n_out = _round_up(action_dim, 128)          # lane-dense output width
    w4p = jnp.pad(w4, ((0, 0), (0, n_out - action_dim)))
    b4p = jnp.pad(b4, (0, n_out - action_dim))

    weights = tuple(w.astype(compute_dtype) for w in (w1, w2, w3, w4p))
    biases = tuple(b.reshape(1, -1).astype(jnp.float32)
                   for b in (b1, b2, b3, b4p))
    return PreparedParams(weights, biases, action_dim)


def _mlp_kernel(x_ref,
                w1_ref, b1_ref,
                w2_ref, b2_ref,
                w3_ref, b3_ref,
                w4_ref, b4_ref,
                o_ref):
    """Whole 4-layer MLP for one batch tile.

    Matmul inputs are in the weight dtype (bf16 by default) and accumulate in
    f32 on the MXU (preferred_element_type); bias add / ReLU run in f32 on the
    VPU.  The output store is lane-dense (padded to a multiple of 128 lanes).
    """
    cdt = w1_ref.dtype

    x = x_ref[...].astype(cdt)

    # Linear(state_dim, 512) + ReLU
    h = jnp.dot(x, w1_ref[...], preferred_element_type=jnp.float32) + b1_ref[...]
    h = jnp.maximum(h, 0.0).astype(cdt)

    # Linear(512, 256) + ReLU
    h = jnp.dot(h, w2_ref[...], preferred_element_type=jnp.float32) + b2_ref[...]
    h = jnp.maximum(h, 0.0).astype(cdt)

    # Dropout(0.3): identity at inference time.

    # Linear(256, 256) + ReLU
    h = jnp.dot(h, w3_ref[...], preferred_element_type=jnp.float32) + b3_ref[...]
    h = jnp.maximum(h, 0.0).astype(cdt)

    # Linear(256, action_dim_padded)
    out = jnp.dot(h, w4_ref[...], preferred_element_type=jnp.float32) + b4_ref[...]
    o_ref[...] = out.astype(o_ref.dtype)


def nn_forward_prepared(state, prepped, *, batch_tile=512,
                        out_store_dtype=jnp.bfloat16,
                        xla_fallback_batch=0):
    """Fast-path forward.  state: [B, state_dim] -> [B, action_dim] (state.dtype).

    `prepped` is the result of prepare_params() (weights already cast/padded).
    `xla_fallback_batch` > 0 routes batches <= that size to plain XLA, where
    kernel launch overhead would dominate; 0 disables the fallback.
    """
    w1, w2, w3, w4 = prepped.weights
    b1, b2, b3, b4 = prepped.biases
    action_dim = prepped.action_dim
    n_out = w4.shape[1]
    B, state_dim = state.shape

    if xla_fallback_batch and B <= xla_fallback_batch:
        # Tiny batch: a few hundred KFLOPs; let XLA handle it.
        cdt = w1.dtype
        h = state.astype(cdt)
        for w, b in ((w1, b1), (w2, b2), (w3, b3)):
            h = jnp.maximum(
                jnp.dot(h, w, preferred_element_type=jnp.float32) + b, 0.0
            ).astype(cdt)
        out = jnp.dot(h, w4, preferred_element_type=jnp.float32) + b4
        return out[:, :action_dim].astype(state.dtype)

    # ---- batch tiling -------------------------------------------------------
    b_r8 = _round_up(B, 8)
    tile = min(batch_tile, b_r8)
    # v7x has 2 TensorCores: when the batch is big enough for two MXU-friendly
    # tiles, cap the tile at half the batch so the "parallel" grid axis has at
    # least 2 steps (no-op penalty on v5e/v6e beyond ~0.35us per extra step).
    if b_r8 >= 512:
        tile = min(tile, _round_up(b_r8 // 2, 8))
    b_pad = _round_up(B, tile)
    x = state if b_pad == B else jnp.pad(state, ((0, b_pad - B), (0, 0)))

    grid = (b_pad // tile,)

    def rep(shape):
        # Constant block index across the grid: Pallas issues the DMA once, so
        # weights/biases stay VMEM-resident for the whole call.
        return pl.BlockSpec(shape, lambda i: (0, 0))

    out = pl.pallas_call(
        _mlp_kernel,
        out_shape=jax.ShapeDtypeStruct((b_pad, n_out), out_store_dtype),
        grid=grid,
        in_specs=[
            pl.BlockSpec((tile, state_dim), lambda i: (i, 0)),  # x tile
            rep(w1.shape), rep(b1.shape),
            rep(w2.shape), rep(b2.shape),
            rep(w3.shape), rep(b3.shape),
            rep(w4.shape), rep(b4.shape),
        ],
        out_specs=pl.BlockSpec((tile, n_out), lambda i: (i, 0)),
        compiler_params=pltpu.CompilerParams(
            dimension_semantics=("parallel",)),
    )(x, w1, b1, w2, b2, w3, b3, w4, b4)

    # Slice off batch / lane padding, restore caller dtype.
    return out[:B, :action_dim].astype(state.dtype)


def nn_forward(state, params, *, batch_tile=512,
               compute_dtype=jnp.bfloat16,
               out_store_dtype=jnp.bfloat16,
               xla_fallback_batch=0):
    """Convenience wrapper taking raw (w, b) params; preps them on the fly.
    Prefer prepare_params() + nn_forward_prepared() in steady-state use."""
    prepped = prepare_params(params, compute_dtype=compute_dtype)
    return nn_forward_prepared(state, prepped, batch_tile=batch_tile,
                               out_store_dtype=out_store_dtype,
                               xla_fallback_batch=xla_fallback_batch)


def init_params(key, state_dim, action_dim):
    """Deterministic init matching the module's _init_weights convention:
    weight ~ N(0, 0.01), bias ~ U(-0.1, 0.1).  Weights stored as [in, out]."""
    dims = [(state_dim, 512), (512, 256), (256, 256), (256, action_dim)]
    params = []
    for (fan_in, fan_out) in dims:
        key, kw, kb = jax.random.split(key, 3)
        w = 0.01 * jax.random.normal(kw, (fan_in, fan_out), dtype=jnp.float32)
        b = jax.random.uniform(kb, (fan_out,), dtype=jnp.float32,
                               minval=-0.1, maxval=0.1)
        params.append((w, b))
    return params


def nn_forward_ref(state, params):
    """Pure-JAX f32 reference for correctness checking (dropout = identity)."""
    (w1, b1), (w2, b2), (w3, b3), (w4, b4) = params
    h = jnp.maximum(state @ w1 + b1, 0.0)
    h = jnp.maximum(h @ w2 + b2, 0.0)
    h = jnp.maximum(h @ w3 + b3, 0.0)
    return h @ w4 + b4


def _rel_err(a, b):
    return jnp.linalg.norm(a - b) / (jnp.linalg.norm(b) + 1e-12)


if __name__ == "__main__":
    key = jax.random.PRNGKey(0)

    state_dim, action_dim = 32, 8
    params = init_params(key, state_dim, action_dim)

    # ---- case 1: small batch, full-f32 kernel path (tight tolerance) --------
    key, k1 = jax.random.split(key)
    state_small = jax.random.normal(k1, (8, state_dim), dtype=jnp.float32)
    out_f32 = jax.block_until_ready(
        nn_forward(state_small, params,
                   compute_dtype=jnp.float32, out_store_dtype=jnp.float32))
    ref_small = nn_forward_ref(state_small, params)
    assert out_f32.shape == (8, action_dim)
    err = _rel_err(out_f32, ref_small)
    assert err < 1e-5, f"f32 path mismatch vs reference (rel_err={err})"

    # ---- case 2: small batch, default bf16 fast path -------------------------
    prepped = prepare_params(params)  # one-time weight cast / pad (hoisted)
    out_bf16 = jax.block_until_ready(nn_forward_prepared(state_small, prepped))
    assert out_bf16.shape == (8, action_dim)
    err = _rel_err(out_bf16, ref_small)
    assert err < 2e-2, f"bf16 path mismatch vs reference (rel_err={err})"

    # ---- case 3: larger batch -> 2-step parallel grid (v7x megacore path) ----
    key, k2 = jax.random.split(key)
    state_big = jax.random.normal(k2, (528, state_dim), dtype=jnp.float32)
    out_big = jax.block_until_ready(nn_forward_prepared(state_big, prepped))
    ref_big = nn_forward_ref(state_big, params)
    assert out_big.shape == (528, action_dim)
    err = _rel_err(out_big, ref_big)
    assert err < 2e-2, f"bf16 multi-tile path mismatch vs reference (rel_err={err})"

    print("KERNEL_OK")
</pallas_src>

<mosaic_0001>
module attributes {stable_mosaic.version = 11 : i64} {
  func.func @_mlp_kernel(%arg0: i32, %arg1: memref<8x32xf32, #tpu.memory_space<vmem>>, %arg2: memref<32x512xf32, #tpu.memory_space<vmem>>, %arg3: memref<1x512xf32, #tpu.memory_space<vmem>>, %arg4: memref<512x256xf32, #tpu.memory_space<vmem>>, %arg5: memref<1x256xf32, #tpu.memory_space<vmem>>, %arg6: memref<256x256xf32, #tpu.memory_space<vmem>>, %arg7: memref<1x256xf32, #tpu.memory_space<vmem>>, %arg8: memref<256x128xf32, #tpu.memory_space<vmem>>, %arg9: memref<1x128xf32, #tpu.memory_space<vmem>>, %arg10: memref<8x128xf32, #tpu.memory_space<vmem>>) attributes {dimension_semantics = [#tpu.dimension_semantics<parallel>], iteration_bounds = array<i64: 1>, scalar_prefetch = 0 : i64, scratch_operands = 0 : i64, tpu.core_type = #tpu.core_type<tc>, window_params = [{transform_indices = @transform_0, window_bounds = array<i64: 8, 32>}, {pipeline_mode = #tpu.pipeline_mode<synchronous>, transform_indices = @transform_1, window_bounds = array<i64: 32, 512>}, {pipeline_mode = #tpu.pipeline_mode<synchronous>, transform_indices = @transform_2, window_bounds = array<i64: 1, 512>}, {pipeline_mode = #tpu.pipeline_mode<synchronous>, transform_indices = @transform_3, window_bounds = array<i64: 512, 256>}, {pipeline_mode = #tpu.pipeline_mode<synchronous>, transform_indices = @transform_4, window_bounds = array<i64: 1, 256>}, {pipeline_mode = #tpu.pipeline_mode<synchronous>, transform_indices = @transform_5, window_bounds = array<i64: 256, 256>}, {pipeline_mode = #tpu.pipeline_mode<synchronous>, transform_indices = @transform_6, window_bounds = array<i64: 1, 256>}, {pipeline_mode = #tpu.pipeline_mode<synchronous>, transform_indices = @transform_7, window_bounds = array<i64: 256, 128>}, {pipeline_mode = #tpu.pipeline_mode<synchronous>, transform_indices = @transform_8, window_bounds = array<i64: 1, 128>}, {transform_indices = @transform_9, window_bounds = array<i64: 8, 128>}]} {
    %c0 = arith.constant 0 : index
    %c0_0 = arith.constant 0 : index
    %0 = vector.load %arg1[%c0, %c0_0] : memref<8x32xf32, #tpu.memory_space<vmem>>, vector<8x32xf32>
    %c0_1 = arith.constant 0 : index
    %c0_2 = arith.constant 0 : index
    %1 = vector.load %arg2[%c0_1, %c0_2] : memref<32x512xf32, #tpu.memory_space<vmem>>, vector<32x512xf32>
    %cst = arith.constant dense<0.000000e+00> : vector<8x512xf32>
    %2 = tpu.matmul %0, %1, %cst {dimension_numbers = #tpu.dot_dimension_numbers<[1], [0], [0], [1], [0, 0, 1, 1], [], []>} : vector<8x32xf32>, vector<32x512xf32>, vector<8x512xf32> -> vector<8x512xf32>
    %c0_3 = arith.constant 0 : index
    %c0_4 = arith.constant 0 : index
    %3 = vector.load %arg3[%c0_3, %c0_4] : memref<1x512xf32, #tpu.memory_space<vmem>>, vector<1x512xf32>
    %4 = vector.broadcast %3 : vector<1x512xf32> to vector<8x512xf32>
    %5 = arith.addf %2, %4 : vector<8x512xf32>
    %cst_5 = arith.constant 0.000000e+00 : f32
    %6 = vector.broadcast %cst_5 : f32 to vector<8x512xf32>
    %7 = arith.maximumf %5, %6 : vector<8x512xf32>
    %c0_6 = arith.constant 0 : index
    %c0_7 = arith.constant 0 : index
    %8 = vector.load %arg4[%c0_6, %c0_7] : memref<512x256xf32, #tpu.memory_space<vmem>>, vector<512x256xf32>
    %cst_8 = arith.constant dense<0.000000e+00> : vector<8x256xf32>
    %9 = tpu.matmul %7, %8, %cst_8 {dimension_numbers = #tpu.dot_dimension_numbers<[1], [0], [0], [1], [0, 0, 1, 1], [], []>} : vector<8x512xf32>, vector<512x256xf32>, vector<8x256xf32> -> vector<8x256xf32>
    %c0_9 = arith.constant 0 : index
    %c0_10 = arith.constant 0 : index
    %10 = vector.load %arg5[%c0_9, %c0_10] : memref<1x256xf32, #tpu.memory_space<vmem>>, vector<1x256xf32>
    %11 = vector.broadcast %10 : vector<1x256xf32> to vector<8x256xf32>
    %12 = arith.addf %9, %11 : vector<8x256xf32>
    %cst_11 = arith.constant 0.000000e+00 : f32
    %13 = vector.broadcast %cst_11 : f32 to vector<8x256xf32>
    %14 = arith.maximumf %12, %13 : vector<8x256xf32>
    %c0_12 = arith.constant 0 : index
    %c0_13 = arith.constant 0 : index
    %15 = vector.load %arg6[%c0_12, %c0_13] : memref<256x256xf32, #tpu.memory_space<vmem>>, vector<256x256xf32>
    %cst_14 = arith.constant dense<0.000000e+00> : vector<8x256xf32>
    %16 = tpu.matmul %14, %15, %cst_14 {dimension_numbers = #tpu.dot_dimension_numbers<[1], [0], [0], [1], [0, 0, 1, 1], [], []>} : vector<8x256xf32>, vector<256x256xf32>, vector<8x256xf32> -> vector<8x256xf32>
    %c0_15 = arith.constant 0 : index
    %c0_16 = arith.constant 0 : index
    %17 = vector.load %arg7[%c0_15, %c0_16] : memref<1x256xf32, #tpu.memory_space<vmem>>, vector<1x256xf32>
    %18 = vector.broadcast %17 : vector<1x256xf32> to vector<8x256xf32>
    %19 = arith.addf %16, %18 : vector<8x256xf32>
    %cst_17 = arith.constant 0.000000e+00 : f32
    %20 = vector.broadcast %cst_17 : f32 to vector<8x256xf32>
    %21 = arith.maximumf %19, %20 : vector<8x256xf32>
    %c0_18 = arith.constant 0 : index
    %c0_19 = arith.constant 0 : index
    %22 = vector.load %arg8[%c0_18, %c0_19] : memref<256x128xf32, #tpu.memory_space<vmem>>, vector<256x128xf32>
    %cst_20 = arith.constant dense<0.000000e+00> : vector<8x128xf32>
    %23 = tpu.matmul %21, %22, %cst_20 {dimension_numbers = #tpu.dot_dimension_numbers<[1], [0], [0], [1], [0, 0, 1, 1], [], []>} : vector<8x256xf32>, vector<256x128xf32>, vector<8x128xf32> -> vector<8x128xf32>
    %c0_21 = arith.constant 0 : index
    %c0_22 = arith.constant 0 : index
    %24 = vector.load %arg9[%c0_21, %c0_22] : memref<1x128xf32, #tpu.memory_space<vmem>>, vector<1x128xf32>
    %25 = vector.broadcast %24 : vector<1x128xf32> to vector<8x128xf32>
    %26 = arith.addf %23, %25 : vector<8x128xf32>
    %c0_23 = arith.constant 0 : index
    %c0_24 = arith.constant 0 : index
    %27 = vector.load %arg10[%c0_23, %c0_24] : memref<8x128xf32, #tpu.memory_space<vmem>>, vector<8x128xf32>
    tpu.vector_store %arg10[%c0_23, %c0_24], %26 {strides = array<i32>} : memref<8x128xf32, #tpu.memory_space<vmem>>, vector<8x128xf32>,
    return
  }
  func.func @transform_0(%arg0: i32) -> (i32, i32) {
    %c0_i32 = arith.constant 0 : i32
    %c0_i32_0 = arith.constant 0 : i32
    return %arg0, %c0_i32 : i32, i32
  }
  func.func @transform_1(%arg0: i32) -> (i32, i32) {
    %c0_i32 = arith.constant 0 : i32
    %c0_i32_0 = arith.constant 0 : i32
    %c0_i32_1 = arith.constant 0 : i32
    return %c0_i32, %c0_i32_0 : i32, i32
  }
  func.func @transform_2(%arg0: i32) -> (i32, i32) {
    %c0_i32 = arith.constant 0 : i32
    %c0_i32_0 = arith.constant 0 : i32
    %c0_i32_1 = arith.constant 0 : i32
    return %c0_i32, %c0_i32_0 : i32, i32
  }
  func.func @transform_3(%arg0: i32) -> (i32, i32) {
    %c0_i32 = arith.constant 0 : i32
    %c0_i32_0 = arith.constant 0 : i32
    %c0_i32_1 = arith.constant 0 : i32
    return %c0_i32, %c0_i32_0 : i32, i32
  }
  func.func @transform_4(%arg0: i32) -> (i32, i32) {
    %c0_i32 = arith.constant 0 : i32
    %c0_i32_0 = arith.constant 0 : i32
    %c0_i32_1 = arith.constant 0 : i32
    return %c0_i32, %c0_i32_0 : i32, i32
  }
  func.func @transform_5(%arg0: i32) -> (i32, i32) {
    %c0_i32 = arith.constant 0 : i32
    %c0_i32_0 = arith.constant 0 : i32
    %c0_i32_1 = arith.constant 0 : i32
    return %c0_i32, %c0_i32_0 : i32, i32
  }
  func.func @transform_6(%arg0: i32) -> (i32, i32) {
    %c0_i32 = arith.constant 0 : i32
    %c0_i32_0 = arith.constant 0 : i32
    %c0_i32_1 = arith.constant 0 : i32
    return %c0_i32, %c0_i32_0 : i32, i32
  }
  func.func @transform_7(%arg0: i32) -> (i32, i32) {
    %c0_i32 = arith.constant 0 : i32
    %c0_i32_0 = arith.constant 0 : i32
    %c0_i32_1 = arith.constant 0 : i32
    return %c0_i32, %c0_i32_0 : i32, i32
  }
  func.func @transform_8(%arg0: i32) -> (i32, i32) {
    %c0_i32 = arith.constant 0 : i32
    %c0_i32_0 = arith.constant 0 : i32
    %c0_i32_1 = arith.constant 0 : i32
    return %c0_i32, %c0_i32_0 : i32, i32
  }
  func.func @transform_9(%arg0: i32) -> (i32, i32) {
    %c0_i32 = arith.constant 0 : i32
    %c0_i32_0 = arith.constant 0 : i32
    return %arg0, %c0_i32 : i32, i32
  }
}

</mosaic_0001>

<llo_original>
// kernel: tpu_custom_call.1
$region0: #{tpu_custom_call.1}
  #allocation0 [shape = 'u32[]', space=smem, size = 0x4, offset = 0x4, fixed_abs, tag = 'smem constant byte address 0x4 - core index']
  #allocation1 [shape = 'u32[144,128]{1,0:T(1,128)}', space=vmem, size = 0x12000, scoped, tag = 'internal scratch']
  %s0 = inlined_call_operand.hbm [shape: f32[8,32], index: 0, kind: input, shape index: {}]
  %s1 = inlined_call_operand.hbm [shape: f32[32,512], index: 1, kind: input, shape index: {}]
  %s2 = inlined_call_operand.vmem [shape: f32[1,512], index: 2, kind: input, shape index: {}]
  %s3 = inlined_call_operand.hbm [shape: f32[512,256], index: 3, kind: input, shape index: {}]
  %s4 = inlined_call_operand.vmem [shape: f32[1,256], index: 4, kind: input, shape index: {}]
  %s5 = inlined_call_operand.hbm [shape: f32[256,256], index: 5, kind: input, shape index: {}]
  %s6 = inlined_call_operand.vmem [shape: f32[1,256], index: 6, kind: input, shape index: {}]
  %s7 = inlined_call_operand.hbm [shape: f32[256,128], index: 7, kind: input, shape index: {}]
  %s8 = inlined_call_operand.vmem [shape: f32[1,128], index: 8, kind: input, shape index: {}]
  %s9 = inlined_call_operand.hbm [shape: f32[8,128], index: 9, kind: output, shape index: {}]
  %s10 = sld [smem:[#allocation0]]
  $region66: #{tpu_custom_call.1} parent=0
    _
  %s12 = ssub.s32 1, %s10
  %s13 = scalar_select 0, %s12, %s10
  $region1: #{tpu_custom_call.1} parent=0
    #allocation2 [shape = 'u8[4096]{0}', space=vmem, size = 0x1000, scoped, tag = 'input window, operand 0, single buffered']
    #allocation3 [shape = 's32[1]{0}', space=sflag, size = 0x4, scoped, tag = 'scoped memory for tpu_custom_call.1']
    #allocation4 [shape = 's32[1]{0}', space=sflag, size = 0x4, scoped, tag = 'scoped memory for tpu_custom_call.1']
    #allocation5 [shape = 'u8[65536]{0}', space=vmem, size = 0x10000, scoped, tag = 'input window, operand 1, single buffered']
    #allocation6 [shape = 's32[1]{0}', space=sflag, size = 0x4, scoped, tag = 'scoped memory for tpu_custom_call.1']
    #allocation7 [shape = 'u8[524288]{0}', space=vmem, size = 0x80000, scoped, tag = 'input window, operand 3, single buffered']
    #allocation8 [shape = 'u8[262144]{0}', space=vmem, size = 0x40000, scoped, tag = 'input window, operand 5, single buffered']
    #allocation9 [shape = 's32[1]{0}', space=sflag, size = 0x4, scoped, tag = 'scoped memory for tpu_custom_call.1']
    #allocation10 [shape = 'u8[131072]{0}', space=vmem, size = 0x20000, scoped, tag = 'input window, operand 7, single buffered']
    #allocation11 [shape = 'u8[4096]{0}', space=vmem, size = 0x1000, scoped, tag = 'output window, operand 0, single buffered']
    %14 = vsyncpa [#allocation3], 0
    %15 = vsyncpa [#allocation6], 0
    %16 = vsyncpa [#allocation9], 0
    %17 = vsyncpa [#allocation4], 0
    // Predicated region
    $region2: #{tpu_custom_call.1} parent=1 // pred_check
      _
    $region3: #{tpu_custom_call.1} parent=1 // pred_check_branch
      %19 = sbr.rel (0) target = $region5
    $region4: #{tpu_custom_call.1} parent=1 // pred_region
      %s21 = ssub.s32 128, 128
      %22 = vsyncadd [#allocation3], %s21
      %s24 = sshll.u32 [#allocation2], 4
      %s25 = int_to_ptr.vmem [resolvable:$true] %s24
      %27 = dma.hbm_to_vmem [thread:$0]  %s0, 128, %s25, [#allocation3]
    $region5: #{tpu_custom_call.1} parent=1 // pred_fallthru
      _
    // Predicated region
    $region6: #{tpu_custom_call.1} parent=1 // pred_check
      _
    $region7: #{tpu_custom_call.1} parent=1 // pred_check_branch
      %29 = sbr.rel (0) target = $region9
    $region8: #{tpu_custom_call.1} parent=1 // pred_region
      %s31 = ssub.s32 2048, 2048
      %32 = vsyncadd [#allocation6], %s31
      %s33 = sshll.u32 [#allocation5], 4
      %s34 = int_to_ptr.vmem [resolvable:$true] %s33
      %39 = dma.hbm_to_vmem [thread:$0]  %s1, 2048, %s34, [#allocation6], 512, 512, 32
    $region9: #{tpu_custom_call.1} parent=1 // pred_fallthru
      _
    // Predicated region
    $region10: #{tpu_custom_call.1} parent=1 // pred_check
      _
    $region11: #{tpu_custom_call.1} parent=1 // pred_check_branch
      %41 = sbr.rel (0) target = $region13
    $region12: #{tpu_custom_call.1} parent=1 // pred_region
      _
    $region13: #{tpu_custom_call.1} parent=1 // pred_fallthru
      _
    // Predicated region
    $region14: #{tpu_custom_call.1} parent=1 // pred_check
      _
    $region15: #{tpu_custom_call.1} parent=1 // pred_check_branch
      %43 = sbr.rel (0) target = $region17
    $region16: #{tpu_custom_call.1} parent=1 // pred_region
      %s45 = ssub.s32 16384, 16384
      %46 = vsyncadd [#allocation6], %s45
      %s47 = sshll.u32 [#allocation7], 4
      %s48 = int_to_ptr.vmem [resolvable:$true] %s47
      %53 = dma.hbm_to_vmem [thread:$0]  %s3, 16384, %s48, [#allocation6], 256, 256, 16
    $region17: #{tpu_custom_call.1} parent=1 // pred_fallthru
      _
    // Predicated region
    $region18: #{tpu_custom_call.1} parent=1 // pred_check
      _
    $region19: #{tpu_custom_call.1} parent=1 // pred_check_branch
      %55 = sbr.rel (0) target = $region21
    $region20: #{tpu_custom_call.1} parent=1 // pred_region
      _
    $region21: #{tpu_custom_call.1} parent=1 // pred_fallthru
      _
    // Predicated region
    $region22: #{tpu_custom_call.1} parent=1 // pred_check
      _
    $region23: #{tpu_custom_call.1} parent=1 // pred_check_branch
      %57 = sbr.rel (0) target = $region25
    $region24: #{tpu_custom_call.1} parent=1 // pred_region
      %s59 = ssub.s32 8192, 8192
      %60 = vsyncadd [#allocation9], %s59
      %s61 = sshll.u32 [#allocation8], 4
      %s62 = int_to_ptr.vmem [resolvable:$true] %s61
      %67 = dma.hbm_to_vmem [thread:$0]  %s5, 8192, %s62, [#allocation9], 256, 256, 16
    $region25: #{tpu_custom_call.1} parent=1 // pred_fallthru
      _
    // Predicated region
    $region26: #{tpu_custom_call.1} parent=1 // pred_check
      _
    $region27: #{tpu_custom_call.1} parent=1 // pred_check_branch
      %69 = sbr.rel (0) target = $region29
    $region28: #{tpu_custom_call.1} parent=1 // pred_region
      _
    $region29: #{tpu_custom_call.1} parent=1 // pred_fallthru
      _
    // Predicated region
    $region30: #{tpu_custom_call.1} parent=1 // pred_check
      _
    $region31: #{tpu_custom_call.1} parent=1 // pred_check_branch
      %71 = sbr.rel (0) target = $region33
    $region32: #{tpu_custom_call.1} parent=1 // pred_region
      %s73 = ssub.s32 4096, 4096
      %74 = vsyncadd [#allocation9], %s73
      %s75 = sshll.u32 [#allocation10], 4
      %s76 = int_to_ptr.vmem [resolvable:$true] %s75
      %81 = dma.hbm_to_vmem [thread:$0]  %s7, 4096, %s76, [#allocation9], 128, 128, 8
    $region33: #{tpu_custom_call.1} parent=1 // pred_fallthru
      _
    // Predicated region
    $region34: #{tpu_custom_call.1} parent=1 // pred_check
      _
    $region35: #{tpu_custom_call.1} parent=1 // pred_check_branch
      %83 = sbr.rel (0) target = $region37
    $region36: #{tpu_custom_call.1} parent=1 // pred_region
      _
    $region37: #{tpu_custom_call.1} parent=1 // pred_fallthru
      _
    // Predicated region
    $region38: #{tpu_custom_call.1} parent=1 // pred_check
      _
    $region39: #{tpu_custom_call.1} parent=1 // pred_check_branch
      %85 = sbr.rel (0) target = $region41
    $region40: #{tpu_custom_call.1} parent=1 // pred_region
      %86 = dma.done [#allocation3], 128
    $region41: #{tpu_custom_call.1} parent=1 // pred_fallthru
      _
    // Predicated region
    $region42: #{tpu_custom_call.1} parent=1 // pred_check
      _
    $region43: #{tpu_custom_call.1} parent=1 // pred_check_branch
      %88 = sbr.rel (0) target = $region45
    $region44: #{tpu_custom_call.1} parent=1 // pred_region
      %89 = dma.done [#allocation6], 2048
    $region45: #{tpu_custom_call.1} parent=1 // pred_fallthru
      _
    // Predicated region
    $region46: #{tpu_custom_call.1} parent=1 // pred_check
      _
    $region47: #{tpu_custom_call.1} parent=1 // pred_check_branch
      %91 = sbr.rel (0) target = $region49
    $region48: #{tpu_custom_call.1} parent=1 // pred_region
      %92 = dma.done [#allocation6], 16384
    $region49: #{tpu_custom_call.1} parent=1 // pred_fallthru
      _
    // Predicated region
    $region50: #{tpu_custom_call.1} parent=1 // pred_check
      _
    $region51: #{tpu_custom_call.1} parent=1 // pred_check_branch
      %94 = sbr.rel (0) target = $region53
    $region52: #{tpu_custom_call.1} parent=1 // pred_region
      %95 = dma.done [#allocation9], 8192
    $region53: #{tpu_custom_call.1} parent=1 // pred_fallthru
      _
    // Predicated region
    $region54: #{tpu_custom_call.1} parent=1 // pred_check
      _
    $region55: #{tpu_custom_call.1} parent=1 // pred_check_branch
      %97 = sbr.rel (0) target = $region57
    $region56: #{tpu_custom_call.1} parent=1 // pred_region
      %98 = dma.done [#allocation9], 4096
    $region57: #{tpu_custom_call.1} parent=1 // pred_fallthru
      _
    %v99 = vld [vmem:[#allocation2] sm:$0xff]
    %v100 = vld [vmem:[#allocation5] sm:$0xff]
    %v101 = vld [vmem:[#allocation5 + $0x8] sm:$0xff]
    %v102 = vld [vmem:[#allocation5 + $0x10] sm:$0xff]
    %v103 = vld [vmem:[#allocation5 + $0x18] sm:$0xff]
    %v104 = vld [vmem:[#allocation5 + $0x20] sm:$0xff]
    %v105 = vld [vmem:[#allocation5 + $0x28] sm:$0xff]
    %v106 = vld [vmem:[#allocation5 + $0x30] sm:$0xff]
    %v107 = vld [vmem:[#allocation5 + $0x38] sm:$0xff]
    %v108 = vld [vmem:[#allocation5 + $0x40] sm:$0xff]
    %v109 = vld [vmem:[#allocation5 + $0x48] sm:$0xff]
    %v110 = vld [vmem:[#allocation5 + $0x50] sm:$0xff]
    %v111 = vld [vmem:[#allocation5 + $0x58] sm:$0xff]
    %v112 = vld [vmem:[#allocation5 + $0x60] sm:$0xff]
    %v113 = vld [vmem:[#allocation5 + $0x68] sm:$0xff]
    %v114 = vld [vmem:[#allocation5 + $0x70] sm:$0xff]
    %v115 = vld [vmem:[#allocation5 + $0x78] sm:$0xff]
    %v116 = vld [vmem:[%s2] sm:$0xf]
    %v118 = vlaneseq
    %v119 = vshrl.u32 %v118, 7
    %v120 = vsub.s32 0, %v119
    %v121 = vrot.slane %v116, %v120
    %v122 = vlaneseq
    %v123 = vshrl.u32 %v122, 7
    %v124 = vsub.s32 1, %v123
    %v125 = vrot.slane %v116, %v124
    %v126 = vlaneseq
    %v127 = vshrl.u32 %v126, 7
    %v128 = vsub.s32 2, %v127
    %v129 = vrot.slane %v116, %v128
    %v130 = vlaneseq
    %v131 = vshrl.u32 %v130, 7
    %v132 = vsub.s32 3, %v131
    %v133 = vrot.slane %v116, %v132
    %vm138 = vcmask 261120
    %v140 = vsel %vm138, %v99, 0
    %142 = vmatprep.subr.mxu0 %v101
    %143 = vmatpush1.msra.mxu0 %v100
    %144 = vmatprep.subr.mxu0 %v105
    %145 = vmatpush1.msra.mxu0 %v104
    %146 = vmatprep.subr.mxu0 %v109
    %147 = vmatpush1.msra.mxu0 %v108
    %148 = vmatprep.subr.mxu0 %v113
    %149 = vmatpush1.msra.mxu0 %v112
    %150 = vmatprep.subr.mxu0 0.0
    %151 = vmatpush1.msra.mxu0 0.0
    %152 = vmatprep.subr.mxu0 0.0
    %153 = vmatpush1.msra.mxu0 0.0
    %154 = vmatprep.subr.mxu0 0.0
    %155 = vmatpush1.msra.mxu0 0.0
    %156 = vmatprep.subr.mxu0 0.0
    %157 = vmatpush1.msra.mxu0 0.0
    %158 = vmatprep.subr.mxu0 0.0
    %159 = vmatpush1.msra.mxu0 0.0
    %160 = vmatprep.subr.mxu0 0.0
    %161 = vmatpush1.msra.mxu0 0.0
    %162 = vmatprep.subr.mxu0 0.0
    %163 = vmatpush1.msra.mxu0 0.0
    %164 = vmatprep.subr.mxu0 0.0
    %165 = vmatpush1.msra.mxu0 0.0
    %166 = vmatprep.subr.mxu0 0.0
    %167 = vmatpush1.msra.mxu0 0.0
    %168 = vmatprep.subr.mxu0 0.0
    %169 = vmatpush1.msra.mxu0 0.0
    %170 = vmatprep.subr.mxu0 0.0
    %171 = vmatpush1.msra.mxu0 0.0
    %172 = vmatprep.subr.mxu0 0.0
    %173 = vmatpush1.msra.mxu0 0.0
    %174 = vmatprep.subr.mxu0 0.0
    %175 = vmatpush1.msra.mxu0 0.0
    %176 = vmatprep.subr.mxu0 0.0
    %177 = vmatpush1.msra.mxu0 0.0
    %178 = vmatprep.subr.mxu0 0.0
    %179 = vmatpush1.msra.mxu0 0.0
    %180 = vmatprep.subr.mxu0 0.0
    %181 = vmatpush1.msra.mxu0 0.0
    %182 = vmatprep.subr.mxu0 0.0
    %183 = vmatpush1.msra.mxu0 0.0
    %184 = vmatprep.subr.mxu0 0.0
    %185 = vmatpush1.msra.mxu0 0.0
    %186 = vmatprep.subr.mxu0 0.0
    %187 = vmatpush1.msra.mxu0 0.0
    %188 = vmatprep.subr.mxu0 0.0
    %189 = vmatpush1.msra.mxu0 0.0
    %190 = vmatprep.subr.mxu0 0.0
    %191 = vmatpush1.msra.mxu0 0.0
    %192 = vmatprep.subr.mxu0 0.0
    %193 = vmatpush1.msra.mxu0 0.0
    %194 = vmatprep.subr.mxu0 0.0
    %195 = vmatpush1.msra.mxu0 0.0
    %196 = vmatprep.subr.mxu0 0.0
    %197 = vmatpush1.msra.mxu0 0.0
    %198 = vmatprep.subr.mxu0 0.0
    %199 = vmatpush1.msra.mxu0 0.0
    %200 = vmatprep.subr.mxu0 0.0
    %201 = vmatpush1.msra.mxu0 0.0
    %202 = vmatprep.subr.mxu0 0.0
    %203 = vmatpush1.msra.mxu0 0.0
    %204 = vmatprep.subr.mxu0 0.0
    %205 = vmatpush1.msra.mxu0 0.0
    %206 = vmatprep.mubr.f32.mxu0 0.0
    %207 = vmatmul.mubr.f32.gmra.mrb[0].mxu0 %v140
    %v208 = vpop.f32.mrb[0].mxu0
    %v209 = vadd.f32 %v121, %v208
    %v210 = vpop.f32.mrb[0].mxu0
    %v211 = vadd.f32 %v125, %v210
    %212 = vdwg.mxu0
    %213 = vmatprep.subr.mxu0 %v103
    %214 = vmatpush1.msra.mxu0 %v102
    %215 = vmatprep.subr.mxu0 %v107
    %216 = vmatpush1.msra.mxu0 %v106
    %217 = vmatprep.subr.mxu0 %v111
    %218 = vmatpush1.msra.mxu0 %v110
    %219 = vmatprep.subr.mxu0 %v115
    %220 = vmatpush1.msra.mxu0 %v114
    %221 = vmatprep.subr.mxu0 0.0
    %222 = vmatpush1.msra.mxu0 0.0
    %223 = vmatprep.subr.mxu0 0.0
    %224 = vmatpush1.msra.mxu0 0.0
    %225 = vmatprep.subr.mxu0 0.0
    %226 = vmatpush1.msra.mxu0 0.0
    %227 = vmatprep.subr.mxu0 0.0
    %228 = vmatpush1.msra.mxu0 0.0
    %229 = vmatprep.subr.mxu0 0.0
    %230 = vmatpush1.msra.mxu0 0.0
    %231 = vmatprep.subr.mxu0 0.0
    %232 = vmatpush1.msra.mxu0 0.0
    %233 = vmatprep.subr.mxu0 0.0
    %234 = vmatpush1.msra.mxu0 0.0
    %235 = vmatprep.subr.mxu0 0.0
    %236 = vmatpush1.msra.mxu0 0.0
    %237 = vmatprep.subr.mxu0 0.0
    %238 = vmatpush1.msra.mxu0 0.0
    %239 = vmatprep.subr.mxu0 0.0
    %240 = vmatpush1.msra.mxu0 0.0
    %241 = vmatprep.subr.mxu0 0.0
    %242 = vmatpush1.msra.mxu0 0.0
    %243 = vmatprep.subr.mxu0 0.0
    %244 = vmatpush1.msra.mxu0 0.0
    %245 = vmatprep.subr.mxu0 0.0
    %246 = vmatpush1.msra.mxu0 0.0
    %247 = vmatprep.subr.mxu0 0.0
    %248 = vmatpush1.msra.mxu0 0.0
    %249 = vmatprep.subr.mxu0 0.0
    %250 = vmatpush1.msra.mxu0 0.0
    %251 = vmatprep.subr.mxu0 0.0
    %252 = vmatpush1.msra.mxu0 0.0
    %253 = vmatprep.subr.mxu0 0.0
    %254 = vmatpush1.msra.mxu0 0.0
    %255 = vmatprep.subr.mxu0 0.0
    %256 = vmatpush1.msra.mxu0 0.0
    %257 = vmatprep.subr.mxu0 0.0
    %258 = vmatpush1.msra.mxu0 0.0
    %259 = vmatprep.subr.mxu0 0.0
    %260 = vmatpush1.msra.mxu0 0.0
    %261 = vmatprep.subr.mxu0 0.0
    %262 = vmatpush1.msra.mxu0 0.0
    %263 = vmatprep.subr.mxu0 0.0
    %264 = vmatpush1.msra.mxu0 0.0
    %265 = vmatprep.subr.mxu0 0.0
    %266 = vmatpush1.msra.mxu0 0.0
    %267 = vmatprep.subr.mxu0 0.0
    %268 = vmatpush1.msra.mxu0 0.0
    %269 = vmatprep.subr.mxu0 0.0
    %270 = vmatpush1.msra.mxu0 0.0
    %271 = vmatprep.subr.mxu0 0.0
    %272 = vmatpush1.msra.mxu0 0.0
    %273 = vmatprep.subr.mxu0 0.0
    %274 = vmatpush1.msra.mxu0 0.0
    %275 = vmatprep.subr.mxu0 0.0
    %276 = vmatpush1.msra.mxu0 0.0
    %277 = vmatprep.mubr.f32.mxu0 0.0
    %278 = vmatmul.mubr.f32.gmra.mrb[0].mxu0 %v140
    %v279 = vpop.f32.mrb[0].mxu0
    %v280 = vadd.f32 %v129, %v279
    %v281 = vpop.f32.mrb[0].mxu0
    %v282 = vadd.f32 %v133, %v281
    %283 = vdwg.mxu0
    %v284 = vmax.f32 %v209, 0.0
    %v285 = vmax.f32 %v211, 0.0
    %v286 = vmax.f32 %v280, 0.0
    %v287 = vmax.f32 %v282, 0.0
    %v288 = vld [vmem:[#allocation7] sm:$0xff]
    %v289 = vld [vmem:[#allocation7 + $0x8] sm:$0xff]
    %v290 = vld [vmem:[#allocation7 + $0x10] sm:$0xff]
    %v291 = vld [vmem:[#allocation7 + $0x18] sm:$0xff]
    %v292 = vld [vmem:[#allocation7 + $0x20] sm:$0xff]
    %v293 = vld [vmem:[#allocation7 + $0x28] sm:$0xff]
    %v294 = vld [vmem:[#allocation7 + $0x30] sm:$0xff]
    %v295 = vld [vmem:[#allocation7 + $0x38] sm:$0xff]
    %v296 = vld [vmem:[#allocation7 + $0x40] sm:$0xff]
    %v297 = vld [vmem:[#allocation7 + $0x48] sm:$0xff]
    %v298 = vld [vmem:[#allocation7 + $0x50] sm:$0xff]
    %v299 = vld [vmem:[#allocation7 + $0x58] sm:$0xff]
    %v300 = vld [vmem:[#allocation7 + $0x60] sm:$0xff]
    %v301 = vld [vmem:[#allocation7 + $0x68] sm:$0xff]
    %v302 = vld [vmem:[#allocation7 + $0x70] sm:$0xff]
    %v303 = vld [vmem:[#allocation7 + $0x78] sm:$0xff]
    %v304 = vld [vmem:[#allocation7 + $0x80] sm:$0xff]
    %v305 = vld [vmem:[#allocation7 + $0x88] sm:$0xff]
    %v306 = vld [vmem:[#allocation7 + $0x90] sm:$0xff]
    %v307 = vld [vmem:[#allocation7 + $0x98] sm:$0xff]
    %v308 = vld [vmem:[#allocation7 + $0xa0] sm:$0xff]
    %v309 = vld [vmem:[#allocation7 + $0xa8] sm:$0xff]
    %v310 = vld [vmem:[#allocation7 + $0xb0] sm:$0xff]
    %v311 = vld [vmem:[#allocation7 + $0xb8] sm:$0xff]
    %v312 = vld [vmem:[#allocation7 + $0xc0] sm:$0xff]
    %v313 = vld [vmem:[#allocation7 + $0xc8] sm:$0xff]
    %v314 = vld [vmem:[#allocation7 + $0xd0] sm:$0xff]
    %v315 = vld [vmem:[#allocation7 + $0xd8] sm:$0xff]
    %v316 = vld [vmem:[#allocation7 + $0xe0] sm:$0xff]
    %v317 = vld [vmem:[#allocation7 + $0xe8] sm:$0xff]
    %v318 = vld [vmem:[#allocation7 + $0xf0] sm:$0xff]
    %v319 = vld [vmem:[#allocation7 + $0xf8] sm:$0xff]
    %v320 = vld [vmem:[#allocation7 + $0x100] sm:$0xff]
    %v321 = vld [vmem:[#allocation7 + $0x108] sm:$0xff]
    %v322 = vld [vmem:[#allocation7 + $0x110] sm:$0xff]
    %v323 = vld [vmem:[#allocation7 + $0x118] sm:$0xff]
    %v324 = vld [vmem:[#allocation7 + $0x120] sm:$0xff]
    %v325 = vld [vmem:[#allocation7 + $0x128] sm:$0xff]
    %v326 = vld [vmem:[#allocation7 + $0x130] sm:$0xff]
    %v327 = vld [vmem:[#allocation7 + $0x138] sm:$0xff]
    %v328 = vld [vmem:[#allocation7 + $0x140] sm:$0xff]
    %v329 = vld [vmem:[#allocation7 + $0x148] sm:$0xff]
    %v330 = vld [vmem:[#allocation7 + $0x150] sm:$0xff]
    %v331 = vld [vmem:[#allocation7 + $0x158] sm:$0xff]
    %v332 = vld [vmem:[#allocation7 + $0x160] sm:$0xff]
    %v333 = vld [vmem:[#allocation7 + $0x168] sm:$0xff]
    %v334 = vld [vmem:[#allocation7 + $0x170] sm:$0xff]
    %v335 = vld [vmem:[#allocation7 + $0x178] sm:$0xff]
    %v336 = vld [vmem:[#allocation7 + $0x180] sm:$0xff]
    %v337 = vld [vmem:[#allocation7 + $0x188] sm:$0xff]
    %v338 = vld [vmem:[#allocation7 + $0x190] sm:$0xff]
    %v339 = vld [vmem:[#allocation7 + $0x198] sm:$0xff]
    %v340 = vld [vmem:[#allocation7 + $0x1a0] sm:$0xff]
    %v341 = vld [vmem:[#allocation7 + $0x1a8] sm:$0xff]
    %v342 = vld [vmem:[#allocation7 + $0x1b0] sm:$0xff]
    %v343 = vld [vmem:[#allocation7 + $0x1b8] sm:$0xff]
    %v344 = vld [vmem:[#allocation7 + $0x1c0] sm:$0xff]
    %v345 = vld [vmem:[#allocation7 + $0x1c8] sm:$0xff]
    %v346 = vld [vmem:[#allocation7 + $0x1d0] sm:$0xff]
    %v347 = vld [vmem:[#allocation7 + $0x1d8] sm:$0xff]
    %v348 = vld [vmem:[#allocation7 + $0x1e0] sm:$0xff]
    %v349 = vld [vmem:[#allocation7 + $0x1e8] sm:$0xff]
    %v350 = vld [vmem:[#allocation7 + $0x1f0] sm:$0xff]
    %v351 = vld [vmem:[#allocation7 + $0x1f8] sm:$0xff]
    %v352 = vld [vmem:[#allocation7 + $0x200] sm:$0xff]
    %v353 = vld [vmem:[#allocation7 + $0x208] sm:$0xff]
    %v354 = vld [vmem:[#allocation7 + $0x210] sm:$0xff]
    %v355 = vld [vmem:[#allocation7 + $0x218] sm:$0xff]
    %v356 = vld [vmem:[#allocation7 + $0x220] sm:$0xff]
    %v357 = vld [vmem:[#allocation7 + $0x228] sm:$0xff]
    %v358 = vld [vmem:[#allocation7 + $0x230] sm:$0xff]
    %v359 = vld [vmem:[#allocation7 + $0x238] sm:$0xff]
    %v360 = vld [vmem:[#allocation7 + $0x240] sm:$0xff]
    %v361 = vld [vmem:[#allocation7 + $0x248] sm:$0xff]
    %v362 = vld [vmem:[#allocation7 + $0x250] sm:$0xff]
    %v363 = vld [vmem:[#allocation7 + $0x258] sm:$0xff]
    %v364 = vld [vmem:[#allocation7 + $0x260] sm:$0xff]
    %v365 = vld [vmem:[#allocation7 + $0x268] sm:$0xff]
    %v366 = vld [vmem:[#allocation7 + $0x270] sm:$0xff]
    %v367 = vld [vmem:[#allocation7 + $0x278] sm:$0xff]
    %v368 = vld [vmem:[#allocation7 + $0x280] sm:$0xff]
    %v369 = vld [vmem:[#allocation7 + $0x288] sm:$0xff]
    %v370 = vld [vmem:[#allocation7 + $0x290] sm:$0xff]
    %v371 = vld [vmem:[#allocation7 + $0x298] sm:$0xff]
    %v372 = vld [vmem:[#allocation7 + $0x2a0] sm:$0xff]
    %v373 = vld [vmem:[#allocation7 + $0x2a8] sm:$0xff]
    %v374 = vld [vmem:[#allocation7 + $0x2b0] sm:$0xff]
    %v375 = vld [vmem:[#allocation7 + $0x2b8] sm:$0xff]
    %v376 = vld [vmem:[#allocation7 + $0x2c0] sm:$0xff]
    %v377 = vld [vmem:[#allocation7 + $0x2c8] sm:$0xff]
    %v378 = vld [vmem:[#allocation7 + $0x2d0] sm:$0xff]
    %v379 = vld [vmem:[#allocation7 + $0x2d8] sm:$0xff]
    %v380 = vld [vmem:[#allocation7 + $0x2e0] sm:$0xff]
    %v381 = vld [vmem:[#allocation7 + $0x2e8] sm:$0xff]
    %v382 = vld [vmem:[#allocation7 + $0x2f0] sm:$0xff]
    %v383 = vld [vmem:[#allocation7 + $0x2f8] sm:$0xff]
    %v384 = vld [vmem:[#allocation7 + $0x300] sm:$0xff]
    %v385 = vld [vmem:[#allocation7 + $0x308] sm:$0xff]
    %v386 = vld [vmem:[#allocation7 + $0x310] sm:$0xff]
    %v387 = vld [vmem:[#allocation7 + $0x318] sm:$0xff]
    %v388 = vld [vmem:[#allocation7 + $0x320] sm:$0xff]
    %v389 = vld [vmem:[#allocation7 + $0x328] sm:$0xff]
    %v390 = vld [vmem:[#allocation7 + $0x330] sm:$0xff]
    %v391 = vld [vmem:[#allocation7 + $0x338] sm:$0xff]
    %v392 = vld [vmem:[#allocation7 + $0x340] sm:$0xff]
    %v393 = vld [vmem:[#allocation7 + $0x348] sm:$0xff]
    %v394 = vld [vmem:[#allocation7 + $0x350] sm:$0xff]
    %v395 = vld [vmem:[#allocation7 + $0x358] sm:$0xff]
    %v396 = vld [vmem:[#allocation7 + $0x360] sm:$0xff]
    %v397 = vld [vmem:[#allocation7 + $0x368] sm:$0xff]
    %v398 = vld [vmem:[#allocation7 + $0x370] sm:$0xff]
    %v399 = vld [vmem:[#allocation7 + $0x378] sm:$0xff]
    %v400 = vld [vmem:[#allocation7 + $0x380] sm:$0xff]
    %v401 = vld [vmem:[#allocation7 + $0x388] sm:$0xff]
    %v402 = vld [vmem:[#allocation7 + $0x390] sm:$0xff]
    %v403 = vld [vmem:[#allocation7 + $0x398] sm:$0xff]
    %v404 = vld [vmem:[#allocation7 + $0x3a0] sm:$0xff]
    %v405 = vld [vmem:[#allocation7 + $0x3a8] sm:$0xff]
    %v406 = vld [vmem:[#allocation7 + $0x3b0] sm:$0xff]
    %v407 = vld [vmem:[#allocation7 + $0x3b8] sm:$0xff]
    %v408 = vld [vmem:[#allocation7 + $0x3c0] sm:$0xff]
    %v409 = vld [vmem:[#allocation7 + $0x3c8] sm:$0xff]
    %v410 = vld [vmem:[#allocation7 + $0x3d0] sm:$0xff]
    %v411 = vld [vmem:[#allocation7 + $0x3d8] sm:$0xff]
    %v412 = vld [vmem:[#allocation7 + $0x3e0] sm:$0xff]
    %v413 = vld [vmem:[#allocation7 + $0x3e8] sm:$0xff]
    %v414 = vld [vmem:[#allocation7 + $0x3f0] sm:$0xff]
    %v415 = vld [vmem:[#allocation7 + $0x3f8] sm:$0xff]
    %v416 = vld [vmem:[%s4] sm:$0x3]
    %v418 = vlaneseq
    %v419 = vshrl.u32 %v418, 7
    %v420 = vsub.s32 0, %v419
    %v421 = vrot.slane %v416, %v420
    %v422 = vlaneseq
    %v423 = vshrl.u32 %v422, 7
    %v424 = vsub.s32 1, %v423
    %v425 = vrot.slane %v416, %v424
    %428 = vmatprep.subr.mxu0 %v289
    %429 = vmatpush1.msra.mxu0 %v288
    %430 = vmatprep.subr.mxu0 %v291
    %431 = vmatpush1.msra.mxu0 %v290
    %432 = vmatprep.subr.mxu0 %v293
    %433 = vmatpush1.msra.mxu0 %v292
    %434 = vmatprep.subr.mxu0 %v295
    %435 = vmatpush1.msra.mxu0 %v294
    %436 = vmatprep.subr.mxu0 %v297
    %437 = vmatpush1.msra.mxu0 %v296
    %438 = vmatprep.subr.mxu0 %v299
    %439 = vmatpush1.msra.mxu0 %v298
    %440 = vmatprep.subr.mxu0 %v301
    %441 = vmatpush1.msra.mxu0 %v300
    %442 = vmatprep.subr.mxu0 %v303
    %443 = vmatpush1.msra.mxu0 %v302
    %444 = vmatprep.subr.mxu0 %v305
    %445 = vmatpush1.msra.mxu0 %v304
    %446 = vmatprep.subr.mxu0 %v307
    %447 = vmatpush1.msra.mxu0 %v306
    %448 = vmatprep.subr.mxu0 %v309
    %449 = vmatpush1.msra.mxu0 %v308
    %450 = vmatprep.subr.mxu0 %v311
    %451 = vmatpush1.msra.mxu0 %v310
    %452 = vmatprep.subr.mxu0 %v313
    %453 = vmatpush1.msra.mxu0 %v312
    %454 = vmatprep.subr.mxu0 %v315
    %455 = vmatpush1.msra.mxu0 %v314
    %456 = vmatprep.subr.mxu0 %v317
    %457 = vmatpush1.msra.mxu0 %v316
    %458 = vmatprep.subr.mxu0 %v319
    %459 = vmatpush1.msra.mxu0 %v318
    %460 = vmatprep.subr.mxu0 %v321
    %461 = vmatpush1.msra.mxu0 %v320
    %462 = vmatprep.subr.mxu0 %v323
    %463 = vmatpush1.msra.mxu0 %v322
    %464 = vmatprep.subr.mxu0 %v325
    %465 = vmatpush1.msra.mxu0 %v324
    %466 = vmatprep.subr.mxu0 %v327
    %467 = vmatpush1.msra.mxu0 %v326
    %468 = vmatprep.subr.mxu0 %v329
    %469 = vmatpush1.msra.mxu0 %v328
    %470 = vmatprep.subr.mxu0 %v331
    %471 = vmatpush1.msra.mxu0 %v330
    %472 = vmatprep.subr.mxu0 %v333
    %473 = vmatpush1.msra.mxu0 %v332
    %474 = vmatprep.subr.mxu0 %v335
    %475 = vmatpush1.msra.mxu0 %v334
    %476 = vmatprep.subr.mxu0 %v337
    %477 = vmatpush1.msra.mxu0 %v336
    %478 = vmatprep.subr.mxu0 %v339
    %479 = vmatpush1.msra.mxu0 %v338
    %480 = vmatprep.subr.mxu0 %v341
    %481 = vmatpush1.msra.mxu0 %v340
    %482 = vmatprep.subr.mxu0 %v343
    %483 = vmatpush1.msra.mxu0 %v342
    %484 = vmatprep.subr.mxu0 %v345
    %485 = vmatpush1.msra.mxu0 %v344
    %486 = vmatprep.subr.mxu0 %v347
    %487 = vmatpush1.msra.mxu0 %v346
    %488 = vmatprep.subr.mxu0 %v349
    %489 = vmatpush1.msra.mxu0 %v348
    %490 = vmatprep.subr.mxu0 %v351
    %491 = vmatpush1.msra.mxu0 %v350
    %492 = vmatprep.mubr.f32.mxu0 %v285
    %493 = vmatmul.mubr.f32.gmra.mrb[0].mxu0 %v284
    %v494 = vpop.f32.mrb[0].mxu0
    %v495 = vadd.f32 %v421, %v494
    %v496 = vpop.f32.mrb[0].mxu0
    %v497 = vadd.f32 %v425, %v496
    %498 = vdwg.mxu0
    %499 = vmatprep.subr.mxu0 %v353
    %500 = vmatpush1.msra.mxu0 %v352
    %501 = vmatprep.subr.mxu0 %v355
    %502 = vmatpush1.msra.mxu0 %v354
    %503 = vmatprep.subr.mxu0 %v357
    %504 = vmatpush1.msra.mxu0 %v356
    %505 = vmatprep.subr.mxu0 %v359
    %506 = vmatpush1.msra.mxu0 %v358
    %507 = vmatprep.subr.mxu0 %v361
    %508 = vmatpush1.msra.mxu0 %v360
    %509 = vmatprep.subr.mxu0 %v363
    %510 = vmatpush1.msra.mxu0 %v362
    %511 = vmatprep.subr.mxu0 %v365
    %512 = vmatpush1.msra.mxu0 %v364
    %513 = vmatprep.subr.mxu0 %v367
    %514 = vmatpush1.msra.mxu0 %v366
    %515 = vmatprep.subr.mxu0 %v369
    %516 = vmatpush1.msra.mxu0 %v368
    %517 = vmatprep.subr.mxu0 %v371
    %518 = vmatpush1.msra.mxu0 %v370
    %519 = vmatprep.subr.mxu0 %v373
    %520 = vmatpush1.msra.mxu0 %v372
    %521 = vmatprep.subr.mxu0 %v375
    %522 = vmatpush1.msra.mxu0 %v374
    %523 = vmatprep.subr.mxu0 %v377
    %524 = vmatpush1.msra.mxu0 %v376
    %525 = vmatprep.subr.mxu0 %v379
    %526 = vmatpush1.msra.mxu0 %v378
    %527 = vmatprep.subr.mxu0 %v381
    %528 = vmatpush1.msra.mxu0 %v380
    %529 = vmatprep.subr.mxu0 %v383
    %530 = vmatpush1.msra.mxu0 %v382
    %531 = vmatprep.subr.mxu0 %v385
    %532 = vmatpush1.msra.mxu0 %v384
    %533 = vmatprep.subr.mxu0 %v387
    %534 = vmatpush1.msra.mxu0 %v386
    %535 = vmatprep.subr.mxu0 %v389
    %536 = vmatpush1.msra.mxu0 %v388
    %537 = vmatprep.subr.mxu0 %v391
    %538 = vmatpush1.msra.mxu0 %v390
    %539 = vmatprep.subr.mxu0 %v393
    %540 = vmatpush1.msra.mxu0 %v392
    %541 = vmatprep.subr.mxu0 %v395
    %542 = vmatpush1.msra.mxu0 %v394
    %543 = vmatprep.subr.mxu0 %v397
    %544 = vmatpush1.msra.mxu0 %v396
    %545 = vmatprep.subr.mxu0 %v399
    %546 = vmatpush1.msra.mxu0 %v398
    %547 = vmatprep.subr.mxu0 %v401
    %548 = vmatpush1.msra.mxu0 %v400
    %549 = vmatprep.subr.mxu0 %v403
    %550 = vmatpush1.msra.mxu0 %v402
    %551 = vmatprep.subr.mxu0 %v405
    %552 = vmatpush1.msra.mxu0 %v404
    %553 = vmatprep.subr.mxu0 %v407
    %554 = vmatpush1.msra.mxu0 %v406
    %555 = vmatprep.subr.mxu0 %v409
    %556 = vmatpush1.msra.mxu0 %v408
    %557 = vmatprep.subr.mxu0 %v411
    %558 = vmatpush1.msra.mxu0 %v410
    %559 = vmatprep.subr.mxu0 %v413
    %560 = vmatpush1.msra.mxu0 %v412
    %561 = vmatprep.subr.mxu0 %v415
    %562 = vmatpush1.msra.mxu0 %v414
    %563 = vmatprep.mubr.f32.mxu0 %v287
    %564 = vmatmul.mubr.f32.gmra.mrb[0].mxu0 %v286
    %v565 = vpop.f32.mrb[0].mxu0
    %v566 = vadd.f32 %v495, %v565
    %v567 = vpop.f32.mrb[0].mxu0
    %v568 = vadd.f32 %v497, %v567
    %569 = vdwg.mxu0
    %v570 = vmax.f32 %v566, 0.0
    %v571 = vmax.f32 %v568, 0.0
    %v572 = vld [vmem:[#allocation8] sm:$0xff]
    %v573 = vld [vmem:[#allocation8 + $0x8] sm:$0xff]
    %v574 = vld [vmem:[#allocation8 + $0x10] sm:$0xff]
    %v575 = vld [vmem:[#allocation8 + $0x18] sm:$0xff]
    %v576 = vld [vmem:[#allocation8 + $0x20] sm:$0xff]
    %v577 = vld [vmem:[#allocation8 + $0x28] sm:$0xff]
    %v578 = vld [vmem:[#allocation8 + $0x30] sm:$0xff]
    %v579 = vld [vmem:[#allocation8 + $0x38] sm:$0xff]
    %v580 = vld [vmem:[#allocation8 + $0x40] sm:$0xff]
    %v581 = vld [vmem:[#allocation8 + $0x48] sm:$0xff]
    %v582 = vld [vmem:[#allocation8 + $0x50] sm:$0xff]
    %v583 = vld [vmem:[#allocation8 + $0x58] sm:$0xff]
    %v584 = vld [vmem:[#allocation8 + $0x60] sm:$0xff]
    %v585 = vld [vmem:[#allocation8 + $0x68] sm:$0xff]
    %v586 = vld [vmem:[#allocation8 + $0x70] sm:$0xff]
    %v587 = vld [vmem:[#allocation8 + $0x78] sm:$0xff]
    %v588 = vld [vmem:[#allocation8 + $0x80] sm:$0xff]
    %v589 = vld [vmem:[#allocation8 + $0x88] sm:$0xff]
    %v590 = vld [vmem:[#allocation8 + $0x90] sm:$0xff]
    %v591 = vld [vmem:[#allocation8 + $0x98] sm:$0xff]
    %v592 = vld [vmem:[#allocation8 + $0xa0] sm:$0xff]
    %v593 = vld [vmem:[#allocation8 + $0xa8] sm:$0xff]
    %v594 = vld [vmem:[#allocation8 + $0xb0] sm:$0xff]
    %v595 = vld [vmem:[#allocation8 + $0xb8] sm:$0xff]
    %v596 = vld [vmem:[#allocation8 + $0xc0] sm:$0xff]
    %v597 = vld [vmem:[#allocation8 + $0xc8] sm:$0xff]
    %v598 = vld [vmem:[#allocation8 + $0xd0] sm:$0xff]
    %v599 = vld [vmem:[#allocation8 + $0xd8] sm:$0xff]
    %v600 = vld [vmem:[#allocation8 + $0xe0] sm:$0xff]
    %v601 = vld [vmem:[#allocation8 + $0xe8] sm:$0xff]
    %v602 = vld [vmem:[#allocation8 + $0xf0] sm:$0xff]
    %v603 = vld [vmem:[#allocation8 + $0xf8] sm:$0xff]
    %v604 = vld [vmem:[#allocation8 + $0x100] sm:$0xff]
    %v605 = vld [vmem:[#allocation8 + $0x108] sm:$0xff]
    %v606 = vld [vmem:[#allocation8 + $0x110] sm:$0xff]
    %v607 = vld [vmem:[#allocation8 + $0x118] sm:$0xff]
    %v608 = vld [vmem:[#allocation8 + $0x120] sm:$0xff]
    %v609 = vld [vmem:[#allocation8 + $0x128] sm:$0xff]
    %v610 = vld [vmem:[#allocation8 + $0x130] sm:$0xff]
    %v611 = vld [vmem:[#allocation8 + $0x138] sm:$0xff]
    %v612 = vld [vmem:[#allocation8 + $0x140] sm:$0xff]
    %v613 = vld [vmem:[#allocation8 + $0x148] sm:$0xff]
    %v614 = vld [vmem:[#allocation8 + $0x150] sm:$0xff]
    %v615 = vld [vmem:[#allocation8 + $0x158] sm:$0xff]
    %v616 = vld [vmem:[#allocation8 + $0x160] sm:$0xff]
    %v617 = vld [vmem:[#allocation8 + $0x168] sm:$0xff]
    %v618 = vld [vmem:[#allocation8 + $0x170] sm:$0xff]
    %v619 = vld [vmem:[#allocation8 + $0x178] sm:$0xff]
    %v620 = vld [vmem:[#allocation8 + $0x180] sm:$0xff]
    %v621 = vld [vmem:[#allocation8 + $0x188] sm:$0xff]
    %v622 = vld [vmem:[#allocation8 + $0x190] sm:$0xff]
    %v623 = vld [vmem:[#allocation8 + $0x198] sm:$0xff]
    %v624 = vld [vmem:[#allocation8 + $0x1a0] sm:$0xff]
    %v625 = vld [vmem:[#allocation8 + $0x1a8] sm:$0xff]
    %v626 = vld [vmem:[#allocation8 + $0x1b0] sm:$0xff]
    %v627 = vld [vmem:[#allocation8 + $0x1b8] sm:$0xff]
    %v628 = vld [vmem:[#allocation8 + $0x1c0] sm:$0xff]
    %v629 = vld [vmem:[#allocation8 + $0x1c8] sm:$0xff]
    %v630 = vld [vmem:[#allocation8 + $0x1d0] sm:$0xff]
    %v631 = vld [vmem:[#allocation8 + $0x1d8] sm:$0xff]
    %v632 = vld [vmem:[#allocation8 + $0x1e0] sm:$0xff]
    %v633 = vld [vmem:[#allocation8 + $0x1e8] sm:$0xff]
    %v634 = vld [vmem:[#allocation8 + $0x1f0] sm:$0xff]
    %v635 = vld [vmem:[#allocation8 + $0x1f8] sm:$0xff]
    %v636 = vld [vmem:[%s6] sm:$0x3]
    %v638 = vlaneseq
    %v639 = vshrl.u32 %v638, 7
    %v640 = vsub.s32 0, %v639
    %v641 = vrot.slane %v636, %v640
    %v642 = vlaneseq
    %v643 = vshrl.u32 %v642, 7
    %v644 = vsub.s32 1, %v643
    %v645 = vrot.slane %v636, %v644
    %648 = vmatprep.subr.mxu0 %v573
    %649 = vmatpush1.msra.mxu0 %v572
    %650 = vmatprep.subr.mxu0 %v575
    %651 = vmatpush1.msra.mxu0 %v574
    %652 = vmatprep.subr.mxu0 %v577
    %653 = vmatpush1.msra.mxu0 %v576
    %654 = vmatprep.subr.mxu0 %v579
    %655 = vmatpush1.msra.mxu0 %v578
    %656 = vmatprep.subr.mxu0 %v581
    %657 = vmatpush1.msra.mxu0 %v580
    %658 = vmatprep.subr.mxu0 %v583
    %659 = vmatpush1.msra.mxu0 %v582
    %660 = vmatprep.subr.mxu0 %v585
    %661 = vmatpush1.msra.mxu0 %v584
    %662 = vmatprep.subr.mxu0 %v587
    %663 = vmatpush1.msra.mxu0 %v586
    %664 = vmatprep.subr.mxu0 %v589
    %665 = vmatpush1.msra.mxu0 %v588
    %666 = vmatprep.subr.mxu0 %v591
    %667 = vmatpush1.msra.mxu0 %v590
    %668 = vmatprep.subr.mxu0 %v593
    %669 = vmatpush1.msra.mxu0 %v592
    %670 = vmatprep.subr.mxu0 %v595
    %671 = vmatpush1.msra.mxu0 %v594
    %672 = vmatprep.subr.mxu0 %v597
    %673 = vmatpush1.msra.mxu0 %v596
    %674 = vmatprep.subr.mxu0 %v599
    %675 = vmatpush1.msra.mxu0 %v598
    %676 = vmatprep.subr.mxu0 %v601
    %677 = vmatpush1.msra.mxu0 %v600
    %678 = vmatprep.subr.mxu0 %v603
    %679 = vmatpush1.msra.mxu0 %v602
    %680 = vmatprep.subr.mxu0 %v605
    %681 = vmatpush1.msra.mxu0 %v604
    %682 = vmatprep.subr.mxu0 %v607
    %683 = vmatpush1.msra.mxu0 %v606
    %684 = vmatprep.subr.mxu0 %v609
    %685 = vmatpush1.msra.mxu0 %v608
    %686 = vmatprep.subr.mxu0 %v611
    %687 = vmatpush1.msra.mxu0 %v610
    %688 = vmatprep.subr.mxu0 %v613
    %689 = vmatpush1.msra.mxu0 %v612
    %690 = vmatprep.subr.mxu0 %v615
    %691 = vmatpush1.msra.mxu0 %v614
    %692 = vmatprep.subr.mxu0 %v617
    %693 = vmatpush1.msra.mxu0 %v616
    %694 = vmatprep.subr.mxu0 %v619
    %695 = vmatpush1.msra.mxu0 %v618
    %696 = vmatprep.subr.mxu0 %v621
    %697 = vmatpush1.msra.mxu0 %v620
    %698 = vmatprep.subr.mxu0 %v623
    %699 = vmatpush1.msra.mxu0 %v622
    %700 = vmatprep.subr.mxu0 %v625
    %701 = vmatpush1.msra.mxu0 %v624
    %702 = vmatprep.subr.mxu0 %v627
    %703 = vmatpush1.msra.mxu0 %v626
    %704 = vmatprep.subr.mxu0 %v629
    %705 = vmatpush1.msra.mxu0 %v628
    %706 = vmatprep.subr.mxu0 %v631
    %707 = vmatpush1.msra.mxu0 %v630
    %708 = vmatprep.subr.mxu0 %v633
    %709 = vmatpush1.msra.mxu0 %v632
    %710 = vmatprep.subr.mxu0 %v635
    %711 = vmatpush1.msra.mxu0 %v634
    %712 = vmatprep.mubr.f32.mxu0 %v571
    %713 = vmatmul.mubr.f32.gmra.mrb[0].mxu0 %v570
    %v714 = vpop.f32.mrb[0].mxu0
    %v715 = vadd.f32 %v641, %v714
    %v716 = vpop.f32.mrb[0].mxu0
    %v717 = vadd.f32 %v645, %v716
    %718 = vdwg.mxu0
    %v719 = vmax.f32 %v715, 0.0
    %v720 = vmax.f32 %v717, 0.0
    %v721 = vld [vmem:[#allocation10] sm:$0xff]
    %v722 = vld [vmem:[#allocation10 + $0x8] sm:$0xff]
    %v723 = vld [vmem:[#allocation10 + $0x10] sm:$0xff]
    %v724 = vld [vmem:[#allocation10 + $0x18] sm:$0xff]
    %v725 = vld [vmem:[#allocation10 + $0x20] sm:$0xff]
    %v726 = vld [vmem:[#allocation10 + $0x28] sm:$0xff]
    %v727 = vld [vmem:[#allocation10 + $0x30] sm:$0xff]
    %v728 = vld [vmem:[#allocation10 + $0x38] sm:$0xff]
    %v729 = vld [vmem:[#allocation10 + $0x40] sm:$0xff]
    %v730 = vld [vmem:[#allocation10 + $0x48] sm:$0xff]
    %v731 = vld [vmem:[#allocation10 + $0x50] sm:$0xff]
    %v732 = vld [vmem:[#allocation10 + $0x58] sm:$0xff]
    %v733 = vld [vmem:[#allocation10 + $0x60] sm:$0xff]
    %v734 = vld [vmem:[#allocation10 + $0x68] sm:$0xff]
    %v735 = vld [vmem:[#allocation10 + $0x70] sm:$0xff]
    %v736 = vld [vmem:[#allocation10 + $0x78] sm:$0xff]
    %v737 = vld [vmem:[#allocation10 + $0x80] sm:$0xff]
    %v738 = vld [vmem:[#allocation10 + $0x88] sm:$0xff]
    %v739 = vld [vmem:[#allocation10 + $0x90] sm:$0xff]
    %v740 = vld [vmem:[#allocation10 + $0x98] sm:$0xff]
    %v741 = vld [vmem:[#allocation10 + $0xa0] sm:$0xff]
    %v742 = vld [vmem:[#allocation10 + $0xa8] sm:$0xff]
    %v743 = vld [vmem:[#allocation10 + $0xb0] sm:$0xff]
    %v744 = vld [vmem:[#allocation10 + $0xb8] sm:$0xff]
    %v745 = vld [vmem:[#allocation10 + $0xc0] sm:$0xff]
    %v746 = vld [vmem:[#allocation10 + $0xc8] sm:$0xff]
    %v747 = vld [vmem:[#allocation10 + $0xd0] sm:$0xff]
    %v748 = vld [vmem:[#allocation10 + $0xd8] sm:$0xff]
    %v749 = vld [vmem:[#allocation10 + $0xe0] sm:$0xff]
    %v750 = vld [vmem:[#allocation10 + $0xe8] sm:$0xff]
    %v751 = vld [vmem:[#allocation10 + $0xf0] sm:$0xff]
    %v752 = vld [vmem:[#allocation10 + $0xf8] sm:$0xff]
    %v753 = vld [vmem:[%s8] sm:$0x1]
    %v755 = vlaneseq
    %v756 = vshrl.u32 %v755, 7
    %v757 = vsub.s32 0, %v756
    %v758 = vrot.slane %v753, %v757
    %760 = vmatprep.subr.mxu0 0.0
    %761 = vmatpush1.msra.mxu0 %v721
    %762 = vmatprep.subr.mxu0 0.0
    %763 = vmatpush1.msra.mxu0 %v722
    %764 = vmatprep.subr.mxu0 0.0
    %765 = vmatpush1.msra.mxu0 %v723
    %766 = vmatprep.subr.mxu0 0.0
    %767 = vmatpush1.msra.mxu0 %v724
    %768 = vmatprep.subr.mxu0 0.0
    %769 = vmatpush1.msra.mxu0 %v725
    %770 = vmatprep.subr.mxu0 0.0
    %771 = vmatpush1.msra.mxu0 %v726
    %772 = vmatprep.subr.mxu0 0.0
    %773 = vmatpush1.msra.mxu0 %v727
    %774 = vmatprep.subr.mxu0 0.0
    %775 = vmatpush1.msra.mxu0 %v728
    %776 = vmatprep.subr.mxu0 0.0
    %777 = vmatpush1.msra.mxu0 %v729
    %778 = vmatprep.subr.mxu0 0.0
    %779 = vmatpush1.msra.mxu0 %v730
    %780 = vmatprep.subr.mxu0 0.0
    %781 = vmatpush1.msra.mxu0 %v731
    %782 = vmatprep.subr.mxu0 0.0
    %783 = vmatpush1.msra.mxu0 %v732
    %784 = vmatprep.subr.mxu0 0.0
    %785 = vmatpush1.msra.mxu0 %v733
    %786 = vmatprep.subr.mxu0 0.0
    %787 = vmatpush1.msra.mxu0 %v734
    %788 = vmatprep.subr.mxu0 0.0
    %789 = vmatpush1.msra.mxu0 %v735
    %790 = vmatprep.subr.mxu0 0.0
    %791 = vmatpush1.msra.mxu0 %v736
    %792 = vmatprep.subr.mxu0 0.0
    %793 = vmatpush1.msra.mxu0 %v737
    %794 = vmatprep.subr.mxu0 0.0
    %795 = vmatpush1.msra.mxu0 %v738
    %796 = vmatprep.subr.mxu0 0.0
    %797 = vmatpush1.msra.mxu0 %v739
    %798 = vmatprep.subr.mxu0 0.0
    %799 = vmatpush1.msra.mxu0 %v740
    %800 = vmatprep.subr.mxu0 0.0
    %801 = vmatpush1.msra.mxu0 %v741
    %802 = vmatprep.subr.mxu0 0.0
    %803 = vmatpush1.msra.mxu0 %v742
    %804 = vmatprep.subr.mxu0 0.0
    %805 = vmatpush1.msra.mxu0 %v743
    %806 = vmatprep.subr.mxu0 0.0
    %807 = vmatpush1.msra.mxu0 %v744
    %808 = vmatprep.subr.mxu0 0.0
    %809 = vmatpush1.msra.mxu0 %v745
    %810 = vmatprep.subr.mxu0 0.0
    %811 = vmatpush1.msra.mxu0 %v746
    %812 = vmatprep.subr.mxu0 0.0
    %813 = vmatpush1.msra.mxu0 %v747
    %814 = vmatprep.subr.mxu0 0.0
    %815 = vmatpush1.msra.mxu0 %v748
    %816 = vmatprep.subr.mxu0 0.0
    %817 = vmatpush1.msra.mxu0 %v749
    %818 = vmatprep.subr.mxu0 0.0
    %819 = vmatpush1.msra.mxu0 %v750
    %820 = vmatprep.subr.mxu0 0.0
    %821 = vmatpush1.msra.mxu0 %v751
    %822 = vmatprep.subr.mxu0 0.0
    %823 = vmatpush1.msra.mxu0 %v752
    %824 = vmatprep.mubr.f32.mxu0 %v720
    %825 = vmatmul.mubr.f32.gmra.mrb[0].mxu0 %v719
    %v826 = vpop.f32.mrb[0].mxu0
    %v827 = vadd.f32 %v758, %v826
    %v828 = vpop.f32.mrb[0].mxu0
    %829 = vdwg.mxu0
    %830 = vst [vmem:[#allocation11] sm:$0xff] %v827
    // Predicated region
    $region58: #{tpu_custom_call.1} parent=1 // pred_check
      _
    $region59: #{tpu_custom_call.1} parent=1 // pred_check_branch
      %832 = sbr.rel (0) target = $region61
    $region60: #{tpu_custom_call.1} parent=1 // pred_region
      %s834 = ssub.s32 128, 128
      %835 = vsyncadd [#allocation4], %s834
      %s837 = sshll.u32 [#allocation11], 4
      %s838 = int_to_ptr.vmem [resolvable:$true] %s837
      %840 = dma.vmem_to_hbm [thread:$0]  %s838, 128, %s9, [#allocation4]
    $region61: #{tpu_custom_call.1} parent=1 // pred_fallthru
      _
    // Predicated region
    $region62: #{tpu_custom_call.1} parent=1 // pred_check
      _
    $region63: #{tpu_custom_call.1} parent=1 // pred_check_branch
      %842 = sbr.rel (0) target = $region65
    $region64: #{tpu_custom_call.1} parent=1 // pred_region
      %843 = dma.done [#allocation4], 128
    $region65: #{tpu_custom_call.1} parent=1 // pred_fallthru
      _
    %844 = vsyncpa [#allocation3], 1
    %845 = vsyncpa [#allocation6], 1
    %846 = vsyncpa [#allocation9], 1
    %847 = vsyncpa [#allocation4], 1

</llo_original>
